<compile_context>
chip_gen: v5e
topology: v5e:2x2
jax: 0.10.0
libtpu: 0.0.40
codegen_flags: <defaults>
</compile_context>

<pallas_src>
import functools

import jax
import jax.numpy as jnp
from jax.experimental import pallas as pl
from jax.experimental.pallas import tpu as pltpu


def adconv_kernel(conv_ref, x_ref, w1_ref, w2_ref, ones_ref, o_ref, *, num):
    # conv_ref: SMEM (2,)   -> [conv_weight, conv_bias]
    # x_ref:    VMEM (tr, P)   lane-packed rows (G logical rows per vector row)
    # w1_ref:   VMEM (P, 2P)   block-diag of G copies of W1.T  (num -> 2*num)
    # w2_ref:   VMEM (2P, P)   block-diag of G copies of W2.T  (2*num -> num)
    # ones_ref: VMEM (P, P)    block-diag of G copies of ones(num, num)
    cw = conv_ref[0]
    cb = conv_ref[1]

    y = x_ref[...].astype(jnp.float32) * cw + cb      # Conv2d(1,1,1) == affine
    p = y > 0.0                                       # shared predicate
    pos = jnp.maximum(y, 0.0)                         # torch.where(y>0, y, 0)

    # mask = Sigmoid(ReLU(pos @ W1.T) @ W2.T); block-diag weights process G
    # logical rows per MXU pass with full-K / lane-dense N.
    w1 = w1_ref[...]
    w2 = w2_ref[...]
    md = w1.dtype                                     # f32 or bf16 MXU operands
    h = jnp.dot(pos.astype(md), w1, preferred_element_type=jnp.float32)
    h = jnp.maximum(h, 0.0)
    m = jnp.dot(h.astype(md), w2, preferred_element_type=jnp.float32)
    mask = jax.nn.sigmoid(m)

    # Softmax over each logical row of where(y>0, y, -100000).  In f32 the
    # reference's exp(-1e5 - rowmax) underflows to exactly 0, so numerators
    # are where(p, exp(y), 0); groups with no positive entry reduce to the
    # uniform 1/num (exp(0)/num in the reference).
    e = jnp.where(p, jnp.exp(y), 0.0)
    denom = jnp.dot(e, ones_ref[...], preferred_element_type=jnp.float32)
    safe = jnp.where(denom > 0.0, denom, 1.0)
    r = pl.reciprocal(safe, approx=True)              # EUP vrcp (free slot)
    r = r * (2.0 - safe * r)                          # 1 Newton step -> ~f32 exact
    sm = jnp.where(denom > 0.0, e * r, 1.0 / num)

    o_ref[...] = (sm * mask).astype(o_ref.dtype)


def _round_up(a, b):
    return -(-a // b) * b


def _choose_row_tile(r_rows, row_tile):
    """Large tiles amortize per-grid-step overhead (~0.35us); keep >=2 grid
    steps when there is enough work so megacore can shard the parallel axis."""
    if r_rows >= 2 * row_tile:
        return row_tile
    half = _round_up(-(-r_rows // 2), 8)   # two steps, sublane-aligned
    return max(8, half)


def adconv_forward(x, conv_w, conv_b, w1, w2, *, row_tile=512,
                   mxu_dtype=jnp.float32):
    """x: (B, L, num).  conv_w/conv_b: scalars.
    w1: (2*num, num)  Linear(num -> 2*num, bias=False)
    w2: (num, 2*num)  Linear(2*num -> num, bias=False)
    """
    B, L, num = x.shape
    assert num <= 128, "p_num must fit within one vreg lane width"
    M = B * L

    G = max(1, 128 // num)            # logical rows packed per vector row
    P = G * num                       # packed lane width (=128 when num | 128)

    r_rows = -(-M // G)               # packed rows needed
    tr = _choose_row_tile(r_rows, row_tile)
    R = _round_up(r_rows, tr)         # padded packed-row count
    Mp = R * G                        # padded logical-row count

    x2d = x.reshape(M, num).astype(jnp.float32)
    if Mp > M:
        x2d = jnp.pad(x2d, ((0, Mp - M), (0, 0)))
    xp = x2d.reshape(R, P)            # free row-major repack: G rows / vreg row

    eye_g = jnp.eye(G, dtype=jnp.float32)
    w1bd = jnp.kron(eye_g, w1.T.astype(jnp.float32)).astype(mxu_dtype)  # (P, 2P)
    w2bd = jnp.kron(eye_g, w2.T.astype(jnp.float32)).astype(mxu_dtype)  # (2P, P)
    ones_bd = jnp.kron(eye_g, jnp.ones((num, num), jnp.float32))        # (P, P)

    conv_params = jnp.array([conv_w, conv_b], dtype=jnp.float32)

    kernel = functools.partial(adconv_kernel, num=num)

    # Advisory cost: 3 MXU passes (K=P, K=2P, K=P), ~4 transcendental ops per
    # element (exp, sigmoid's exp/recip, vrcp), streaming in+out of the rows.
    cost = pl.CostEstimate(
        flops=10 * R * P * P,
        transcendentals=4 * R * P,
        bytes_accessed=2 * R * P * 4 + (2 * P * P + 2 * P * P + P * P) * 4,
    )

    outp = pl.pallas_call(
        kernel,
        out_shape=jax.ShapeDtypeStruct((R, P), x.dtype),
        grid_spec=pltpu.PrefetchScalarGridSpec(
            num_scalar_prefetch=0,
            grid=(R // tr,),
            in_specs=[
                pl.BlockSpec(memory_space=pltpu.SMEM),        # conv weight/bias
                pl.BlockSpec((tr, P), lambda i: (i, 0)),      # packed input rows
                pl.BlockSpec((P, 2 * P), lambda i: (0, 0)),   # W1.T block-diag
                pl.BlockSpec((2 * P, P), lambda i: (0, 0)),   # W2.T block-diag
                pl.BlockSpec((P, P), lambda i: (0, 0)),       # group-sum ones
            ],
            out_specs=pl.BlockSpec((tr, P), lambda i: (i, 0)),
        ),
        compiler_params=pltpu.CompilerParams(
            dimension_semantics=("parallel",)),
        cost_estimate=cost,
    )(conv_params, xp, w1bd, w2bd, ones_bd)

    out2d = outp.reshape(Mp, num)[:M]
    return out2d.reshape(B, L, num)


def adconv_reference(x, conv_w, conv_b, w1, w2):
    """Plain-JAX reference mirroring the PyTorch forward (f32-exact matmuls)."""
    hi = jax.lax.Precision.HIGHEST
    y = x * conv_w + conv_b
    pos = jnp.where(y > 0, y, 0.0)
    neg = jnp.where(y > 0, y, -100000.0)
    h = jnp.maximum(jnp.matmul(pos, w1.T, precision=hi), 0.0)
    mask = jax.nn.sigmoid(jnp.matmul(h, w2.T, precision=hi))
    sm = jax.nn.softmax(neg, axis=-1)
    return sm * mask


def _run_case(B, L, p_num):
    key = jax.random.PRNGKey(0)
    kx, kcw, kcb, kw1, kw2 = jax.random.split(key, 5)

    # Deterministic synthetic parameters (shapes per module __init__).
    x = jax.random.normal(kx, (B, L, p_num), dtype=jnp.float32)
    conv_w = jax.random.normal(kcw, (), dtype=jnp.float32) * 0.5   # Conv2d(1,1,1).weight
    conv_b = jax.random.normal(kcb, (), dtype=jnp.float32) * 0.1   # Conv2d(1,1,1).bias
    w1 = jax.random.normal(kw1, (2 * p_num, p_num), dtype=jnp.float32) * 0.3
    w2 = jax.random.normal(kw2, (p_num, 2 * p_num), dtype=jnp.float32) * 0.3

    ref = adconv_reference(x, conv_w, conv_b, w1, w2)

    # f32 MXU operands: numerically faithful to the PyTorch module.
    out = jax.block_until_ready(adconv_forward(x, conv_w, conv_b, w1, w2))
    assert out.shape == (B, L, p_num)
    assert jnp.allclose(out, ref, atol=1e-5, rtol=1e-5), "f32 kernel mismatch"

    # bf16 MXU operands: full-rate MXU path on v6e/v7x (looser tolerance; the
    # softmax path stays f32 so only the sigmoid mask sees bf16 rounding).
    out_bf16 = jax.block_until_ready(
        adconv_forward(x, conv_w, conv_b, w1, w2, mxu_dtype=jnp.bfloat16))
    assert jnp.allclose(out_bf16, ref, atol=2e-2, rtol=2e-2), "bf16 kernel mismatch"


if __name__ == "__main__":
    # p_num=9 matches multi_att's default top=9 and exercises the
    # non-128-divisible lane-packing path (G=14, P=126).
    _run_case(2, 16, 9)
    # Larger row count: exercises the multi-grid-step pipeline and the
    # packed-row padding / remainder path (G=16, 2 grid steps).
    _run_case(2, 1000, 8)
    print("KERNEL_OK")
</pallas_src>

<mosaic_0001>
module attributes {stable_mosaic.version = 11 : i64} {
  func.func @adconv_kernel(%arg0: i32, %arg1: memref<2xf32, #tpu.memory_space<smem>>, %arg2: memref<8x126xf32, #tpu.memory_space<vmem>>, %arg3: memref<126x252xf32, #tpu.memory_space<vmem>>, %arg4: memref<252x126xf32, #tpu.memory_space<vmem>>, %arg5: memref<126x126xf32, #tpu.memory_space<vmem>>, %arg6: memref<8x126xf32, #tpu.memory_space<vmem>>) attributes {dimension_semantics = [#tpu.dimension_semantics<parallel>], iteration_bounds = array<i64: 1>, scalar_prefetch = 0 : i64, scratch_operands = 0 : i64, tpu.core_type = #tpu.core_type<tc>, window_params = [{transform_indices = @transform_0, window_bounds = array<i64: 2>}, {transform_indices = @transform_1, window_bounds = array<i64: 8, 126>}, {pipeline_mode = #tpu.pipeline_mode<synchronous>, transform_indices = @transform_2, window_bounds = array<i64: 126, 252>}, {pipeline_mode = #tpu.pipeline_mode<synchronous>, transform_indices = @transform_3, window_bounds = array<i64: 252, 126>}, {pipeline_mode = #tpu.pipeline_mode<synchronous>, transform_indices = @transform_4, window_bounds = array<i64: 126, 126>}, {transform_indices = @transform_5, window_bounds = array<i64: 8, 126>}]} {
    %c0 = arith.constant 0 : index
    %0 = memref.load %arg1[%c0] : memref<2xf32, #tpu.memory_space<smem>>
    %c1 = arith.constant 1 : index
    %1 = memref.load %arg1[%c1] : memref<2xf32, #tpu.memory_space<smem>>
    %c0_0 = arith.constant 0 : index
    %c0_1 = arith.constant 0 : index
    %2 = vector.load %arg2[%c0_0, %c0_1] : memref<8x126xf32, #tpu.memory_space<vmem>>, vector<8x126xf32>
    %3 = vector.broadcast %0 : f32 to vector<8x126xf32>
    %4 = arith.mulf %2, %3 : vector<8x126xf32>
    %5 = vector.broadcast %1 : f32 to vector<8x126xf32>
    %6 = arith.addf %4, %5 : vector<8x126xf32>
    %cst = arith.constant 0.000000e+00 : f32
    %7 = vector.broadcast %cst : f32 to vector<8x126xf32>
    %8 = arith.cmpf ogt, %6, %7 : vector<8x126xf32>
    %cst_2 = arith.constant 0.000000e+00 : f32
    %9 = vector.broadcast %cst_2 : f32 to vector<8x126xf32>
    %10 = arith.maximumf %6, %9 : vector<8x126xf32>
    %c0_3 = arith.constant 0 : index
    %c0_4 = arith.constant 0 : index
    %11 = vector.load %arg3[%c0_3, %c0_4] : memref<126x252xf32, #tpu.memory_space<vmem>>, vector<126x252xf32>
    %c0_5 = arith.constant 0 : index
    %c0_6 = arith.constant 0 : index
    %12 = vector.load %arg4[%c0_5, %c0_6] : memref<252x126xf32, #tpu.memory_space<vmem>>, vector<252x126xf32>
    %cst_7 = arith.constant dense<0.000000e+00> : vector<8x252xf32>
    %13 = tpu.matmul %10, %11, %cst_7 {dimension_numbers = #tpu.dot_dimension_numbers<[1], [0], [0], [1], [0, 0, 1, 1], [], []>} : vector<8x126xf32>, vector<126x252xf32>, vector<8x252xf32> -> vector<8x252xf32>
    %cst_8 = arith.constant 0.000000e+00 : f32
    %14 = vector.broadcast %cst_8 : f32 to vector<8x252xf32>
    %15 = arith.maximumf %13, %14 : vector<8x252xf32>
    %cst_9 = arith.constant dense<0.000000e+00> : vector<8x126xf32>
    %16 = tpu.matmul %15, %12, %cst_9 {dimension_numbers = #tpu.dot_dimension_numbers<[1], [0], [0], [1], [0, 0, 1, 1], [], []>} : vector<8x252xf32>, vector<252x126xf32>, vector<8x126xf32> -> vector<8x126xf32>
    %17 = arith.negf %16 : vector<8x126xf32>
    %18 = math.exp %17 : vector<8x126xf32>
    %cst_10 = arith.constant 1.000000e+00 : f32
    %19 = vector.broadcast %cst_10 : f32 to vector<8x126xf32>
    %20 = arith.addf %19, %18 : vector<8x126xf32>
    %21 = arith.divf %19, %20 : vector<8x126xf32>
    %22 = math.exp %6 : vector<8x126xf32>
    %cst_11 = arith.constant 0.000000e+00 : f32
    %23 = vector.broadcast %cst_11 : f32 to vector<8x126xf32>
    %24 = arith.select %8, %22, %23 : vector<8x126xi1>, vector<8x126xf32>
    %c0_12 = arith.constant 0 : index
    %c0_13 = arith.constant 0 : index
    %25 = vector.load %arg5[%c0_12, %c0_13] : memref<126x126xf32, #tpu.memory_space<vmem>>, vector<126x126xf32>
    %cst_14 = arith.constant dense<0.000000e+00> : vector<8x126xf32>
    %26 = tpu.matmul %24, %25, %cst_14 {dimension_numbers = #tpu.dot_dimension_numbers<[1], [0], [0], [1], [0, 0, 1, 1], [], []>} : vector<8x126xf32>, vector<126x126xf32>, vector<8x126xf32> -> vector<8x126xf32>
    %cst_15 = arith.constant 0.000000e+00 : f32
    %27 = vector.broadcast %cst_15 : f32 to vector<8x126xf32>
    %28 = arith.cmpf ogt, %26, %27 : vector<8x126xf32>
    %cst_16 = arith.constant 1.000000e+00 : f32
    %29 = vector.broadcast %cst_16 : f32 to vector<8x126xf32>
    %30 = arith.select %28, %26, %29 : vector<8x126xi1>, vector<8x126xf32>
    %31 = tpu.reciprocal %30 {approx = true} : vector<8x126xf32> -> vector<8x126xf32>
    %32 = arith.mulf %30, %31 : vector<8x126xf32>
    %cst_17 = arith.constant 2.000000e+00 : f32
    %33 = vector.broadcast %cst_17 : f32 to vector<8x126xf32>
    %34 = arith.subf %33, %32 : vector<8x126xf32>
    %35 = arith.mulf %31, %34 : vector<8x126xf32>
    %cst_18 = arith.constant 0.000000e+00 : f32
    %36 = vector.broadcast %cst_18 : f32 to vector<8x126xf32>
    %37 = arith.cmpf ogt, %26, %36 : vector<8x126xf32>
    %38 = arith.mulf %24, %35 : vector<8x126xf32>
    %cst_19 = arith.constant 0.111111112 : f32
    %39 = vector.broadcast %cst_19 : f32 to vector<8x126xf32>
    %40 = arith.select %37, %38, %39 : vector<8x126xi1>, vector<8x126xf32>
    %41 = arith.mulf %40, %21 : vector<8x126xf32>
    %c0_20 = arith.constant 0 : index
    %c0_21 = arith.constant 0 : index
    %42 = vector.load %arg6[%c0_20, %c0_21] : memref<8x126xf32, #tpu.memory_space<vmem>>, vector<8x126xf32>
    tpu.vector_store %arg6[%c0_20, %c0_21], %41 {strides = array<i32>} : memref<8x126xf32, #tpu.memory_space<vmem>>, vector<8x126xf32>,
    return
  }
  func.func @transform_0(%arg0: i32) -> i32 {
    %c0_i32 = arith.constant 0 : i32
    %c0_i32_0 = arith.constant 0 : i32
    return %c0_i32 : i32
  }
  func.func @transform_1(%arg0: i32) -> (i32, i32) {
    %c0_i32 = arith.constant 0 : i32
    %c0_i32_0 = arith.constant 0 : i32
    return %arg0, %c0_i32 : i32, i32
  }
  func.func @transform_2(%arg0: i32) -> (i32, i32) {
    %c0_i32 = arith.constant 0 : i32
    %c0_i32_0 = arith.constant 0 : i32
    %c0_i32_1 = arith.constant 0 : i32
    return %c0_i32, %c0_i32_0 : i32, i32
  }
  func.func @transform_3(%arg0: i32) -> (i32, i32) {
    %c0_i32 = arith.constant 0 : i32
    %c0_i32_0 = arith.constant 0 : i32
    %c0_i32_1 = arith.constant 0 : i32
    return %c0_i32, %c0_i32_0 : i32, i32
  }
  func.func @transform_4(%arg0: i32) -> (i32, i32) {
    %c0_i32 = arith.constant 0 : i32
    %c0_i32_0 = arith.constant 0 : i32
    %c0_i32_1 = arith.constant 0 : i32
    return %c0_i32, %c0_i32_0 : i32, i32
  }
  func.func @transform_5(%arg0: i32) -> (i32, i32) {
    %c0_i32 = arith.constant 0 : i32
    %c0_i32_0 = arith.constant 0 : i32
    return %arg0, %c0_i32 : i32, i32
  }
}

</mosaic_0001>

<llo_original>
// kernel: tpu_custom_call.1
$region0: #{tpu_custom_call.1}
  #allocation0 [shape = 'u32[]', space=smem, size = 0x4, offset = 0x4, fixed_abs, tag = 'smem constant byte address 0x4 - core index']
  #allocation1 [shape = 'u32[72,128]{1,0:T(1,128)}', space=vmem, size = 0x9000, scoped, tag = 'internal scratch']
  %s0 = inlined_call_operand.hbm [shape: f32[2], index: 0, kind: input, shape index: {}]
  %s1 = inlined_call_operand.hbm [shape: f32[8,126], index: 1, kind: input, shape index: {}]
  %s2 = inlined_call_operand.hbm [shape: f32[126,252], index: 2, kind: input, shape index: {}]
  %s3 = inlined_call_operand.hbm [shape: f32[252,126], index: 3, kind: input, shape index: {}]
  %s4 = inlined_call_operand.hbm [shape: f32[126,126], index: 4, kind: input, shape index: {}]
  %s5 = inlined_call_operand.hbm [shape: f32[8,126], index: 5, kind: output, shape index: {}]
  %s6 = sld [smem:[#allocation0]]
  $region50: #{tpu_custom_call.1} parent=0
    _
  %s8 = ssub.s32 1, %s6
  %s9 = scalar_select 0, %s8, %s6
  $region1: #{tpu_custom_call.1} parent=0
    #allocation2 [shape = 'u8[512]{0}', space=smem, size = 0x200, scoped, tag = 'input window, operand 0, single buffered']
    #allocation3 [shape = 's32[1]{0}', space=sflag, size = 0x4, scoped, tag = 'scoped memory for tpu_custom_call.1']
    #allocation4 [shape = 's32[1]{0}', space=sflag, size = 0x4, scoped, tag = 'scoped memory for tpu_custom_call.1']
    #allocation5 [shape = 's32[1]{0}', space=sflag, size = 0x4, scoped, tag = 'scoped memory for tpu_custom_call.1']
    #allocation6 [shape = 'u8[4096]{0}', space=vmem, size = 0x1000, scoped, tag = 'input window, operand 1, single buffered']
    #allocation7 [shape = 'u8[131072]{0}', space=vmem, size = 0x20000, scoped, tag = 'input window, operand 2, single buffered']
    #allocation8 [shape = 's32[1]{0}', space=sflag, size = 0x4, scoped, tag = 'scoped memory for tpu_custom_call.1']
    #allocation9 [shape = 'u8[131072]{0}', space=vmem, size = 0x20000, scoped, tag = 'input window, operand 3, single buffered']
    #allocation10 [shape = 'u8[65536]{0}', space=vmem, size = 0x10000, scoped, tag = 'input window, operand 4, single buffered']
    #allocation11 [shape = 's32[1]{0}', space=sflag, size = 0x4, scoped, tag = 'scoped memory for tpu_custom_call.1']
    #allocation12 [shape = 'u8[4096]{0}', space=vmem, size = 0x1000, scoped, tag = 'output window, operand 0, single buffered']
    %10 = vsyncpa [#allocation5], 0
    %11 = vsyncpa [#allocation3], 0
    %12 = vsyncpa [#allocation8], 0
    %13 = vsyncpa [#allocation11], 0
    %14 = vsyncpa [#allocation4], 0
    // Predicated region
    $region2: #{tpu_custom_call.1} parent=1 // pred_check
      _
    $region3: #{tpu_custom_call.1} parent=1 // pred_check_branch
      %16 = sbr.rel (0) target = $region5
    $region4: #{tpu_custom_call.1} parent=1 // pred_region
      %18 = vsyncadd [#allocation5], 0
      %s20 = sshll.u32 %s0, 4
      %s21 = int_to_ptr.hbm [resolvable:$true] %s20
      %23 = dma.hbm_to_smem %s21, 16, [#allocation2], [#allocation5]
    $region5: #{tpu_custom_call.1} parent=1 // pred_fallthru
      _
    // Predicated region
    $region6: #{tpu_custom_call.1} parent=1 // pred_check
      _
    $region7: #{tpu_custom_call.1} parent=1 // pred_check_branch
      %25 = sbr.rel (0) target = $region9
    $region8: #{tpu_custom_call.1} parent=1 // pred_region
      %27 = vsyncadd [#allocation3], 0
      %s29 = sshll.u32 %s1, 4
      %s30 = int_to_ptr.hbm [resolvable:$true] %s29
      %s31 = sshll.u32 [#allocation6], 4
      %s32 = int_to_ptr.vmem [resolvable:$true] %s31
      %34 = dma.hbm_to_vmem [thread:$0]  %s30, 128, %s32, [#allocation3]
    $region9: #{tpu_custom_call.1} parent=1 // pred_fallthru
      _
    // Predicated region
    $region10: #{tpu_custom_call.1} parent=1 // pred_check
      _
    $region11: #{tpu_custom_call.1} parent=1 // pred_check_branch
      %36 = sbr.rel (0) target = $region13
    $region12: #{tpu_custom_call.1} parent=1 // pred_region
      %38 = vsyncadd [#allocation8], 0
      %s39 = sshll.u32 %s2, 4
      %s40 = int_to_ptr.hbm [resolvable:$true] %s39
      %s41 = sshll.u32 [#allocation7], 4
      %s42 = int_to_ptr.vmem [resolvable:$true] %s41
      %47 = dma.hbm_to_vmem [thread:$0]  %s40, 4096, %s42, [#allocation8], 256, 256, 16
    $region13: #{tpu_custom_call.1} parent=1 // pred_fallthru
      _
    // Predicated region
    $region14: #{tpu_custom_call.1} parent=1 // pred_check
      _
    $region15: #{tpu_custom_call.1} parent=1 // pred_check_branch
      %49 = sbr.rel (0) target = $region17
    $region16: #{tpu_custom_call.1} parent=1 // pred_region
      %51 = vsyncadd [#allocation8], 0
      %s52 = sshll.u32 %s3, 4
      %s53 = int_to_ptr.hbm [resolvable:$true] %s52
      %s54 = sshll.u32 [#allocation9], 4
      %s55 = int_to_ptr.vmem [resolvable:$true] %s54
      %60 = dma.hbm_to_vmem [thread:$0]  %s53, 4096, %s55, [#allocation8], 128, 128, 8
    $region17: #{tpu_custom_call.1} parent=1 // pred_fallthru
      _
    // Predicated region
    $region18: #{tpu_custom_call.1} parent=1 // pred_check
      _
    $region19: #{tpu_custom_call.1} parent=1 // pred_check_branch
      %62 = sbr.rel (0) target = $region21
    $region20: #{tpu_custom_call.1} parent=1 // pred_region
      %64 = vsyncadd [#allocation11], 0
      %s65 = sshll.u32 %s4, 4
      %s66 = int_to_ptr.hbm [resolvable:$true] %s65
      %s67 = sshll.u32 [#allocation10], 4
      %s68 = int_to_ptr.vmem [resolvable:$true] %s67
      %73 = dma.hbm_to_vmem [thread:$0]  %s66, 2048, %s68, [#allocation11], 128, 128, 8
    $region21: #{tpu_custom_call.1} parent=1 // pred_fallthru
      _
    // Predicated region
    $region22: #{tpu_custom_call.1} parent=1 // pred_check
      _
    $region23: #{tpu_custom_call.1} parent=1 // pred_check_branch
      %75 = sbr.rel (0) target = $region25
    $region24: #{tpu_custom_call.1} parent=1 // pred_region
      %77 = dma.done [#allocation5], 16
    $region25: #{tpu_custom_call.1} parent=1 // pred_fallthru
      _
    // Predicated region
    $region26: #{tpu_custom_call.1} parent=1 // pred_check
      _
    $region27: #{tpu_custom_call.1} parent=1 // pred_check_branch
      %79 = sbr.rel (0) target = $region29
    $region28: #{tpu_custom_call.1} parent=1 // pred_region
      %81 = dma.done [#allocation3], 128
    $region29: #{tpu_custom_call.1} parent=1 // pred_fallthru
      _
    // Predicated region
    $region30: #{tpu_custom_call.1} parent=1 // pred_check
      _
    $region31: #{tpu_custom_call.1} parent=1 // pred_check_branch
      %83 = sbr.rel (0) target = $region33
    $region32: #{tpu_custom_call.1} parent=1 // pred_region
      %85 = dma.done [#allocation8], 4096
    $region33: #{tpu_custom_call.1} parent=1 // pred_fallthru
      _
    // Predicated region
    $region34: #{tpu_custom_call.1} parent=1 // pred_check
      _
    $region35: #{tpu_custom_call.1} parent=1 // pred_check_branch
      %87 = sbr.rel (0) target = $region37
    $region36: #{tpu_custom_call.1} parent=1 // pred_region
      %89 = dma.done [#allocation8], 4096
    $region37: #{tpu_custom_call.1} parent=1 // pred_fallthru
      _
    // Predicated region
    $region38: #{tpu_custom_call.1} parent=1 // pred_check
      _
    $region39: #{tpu_custom_call.1} parent=1 // pred_check_branch
      %91 = sbr.rel (0) target = $region41
    $region40: #{tpu_custom_call.1} parent=1 // pred_region
      %93 = dma.done [#allocation11], 2048
    $region41: #{tpu_custom_call.1} parent=1 // pred_fallthru
      _
    %94 = sfence
    %s95 = sld [smem:[#allocation2]]
    %s96 = sld [smem:[#allocation2 + $0x1]]
    %v97 = vld [vmem:[#allocation6] sm:$0xff]
    %v98 = vstv %s95
    %v99 = vmul.f32 %v97, %v98
    %v100 = vstv %s96
    %v101 = vadd.f32 %v99, %v100
    %vm102 = vcmp.gt.f32.partialorder %v101, 0.0
    %v103 = vmax.f32 %v101, 0.0
    %v104 = vld [vmem:[#allocation7] sm:$0xff]
    %v105 = vld [vmem:[#allocation7 + $0x8] sm:$0xff]
    %v106 = vld [vmem:[#allocation7 + $0x10] sm:$0xff]
    %v107 = vld [vmem:[#allocation7 + $0x18] sm:$0xff]
    %v108 = vld [vmem:[#allocation7 + $0x20] sm:$0xff]
    %v109 = vld [vmem:[#allocation7 + $0x28] sm:$0xff]
    %v110 = vld [vmem:[#allocation7 + $0x30] sm:$0xff]
    %v111 = vld [vmem:[#allocation7 + $0x38] sm:$0xff]
    %v112 = vld [vmem:[#allocation7 + $0x40] sm:$0xff]
    %v113 = vld [vmem:[#allocation7 + $0x48] sm:$0xff]
    %v114 = vld [vmem:[#allocation7 + $0x50] sm:$0xff]
    %v115 = vld [vmem:[#allocation7 + $0x58] sm:$0xff]
    %v116 = vld [vmem:[#allocation7 + $0x60] sm:$0xff]
    %v117 = vld [vmem:[#allocation7 + $0x68] sm:$0xff]
    %v118 = vld [vmem:[#allocation7 + $0x70] sm:$0xff]
    %v119 = vld [vmem:[#allocation7 + $0x78] sm:$0xff]
    %v120 = vld [vmem:[#allocation7 + $0x80] sm:$0xff]
    %v121 = vld [vmem:[#allocation7 + $0x88] sm:$0xff]
    %v122 = vld [vmem:[#allocation7 + $0x90] sm:$0xff]
    %v123 = vld [vmem:[#allocation7 + $0x98] sm:$0xff]
    %v124 = vld [vmem:[#allocation7 + $0xa0] sm:$0xff]
    %v125 = vld [vmem:[#allocation7 + $0xa8] sm:$0xff]
    %v126 = vld [vmem:[#allocation7 + $0xb0] sm:$0xff]
    %v127 = vld [vmem:[#allocation7 + $0xb8] sm:$0xff]
    %v128 = vld [vmem:[#allocation7 + $0xc0] sm:$0xff]
    %v129 = vld [vmem:[#allocation7 + $0xc8] sm:$0xff]
    %v130 = vld [vmem:[#allocation7 + $0xd0] sm:$0xff]
    %v131 = vld [vmem:[#allocation7 + $0xd8] sm:$0xff]
    %v132 = vld [vmem:[#allocation7 + $0xe0] sm:$0xff]
    %v133 = vld [vmem:[#allocation7 + $0xe8] sm:$0xff]
    %v134 = vld [vmem:[#allocation7 + $0xf0] sm:$0x3f]
    %v135 = vld [vmem:[#allocation7 + $0xf8] sm:$0x3f]
    %v136 = vld [vmem:[#allocation9] sm:$0xff]
    %v137 = vld [vmem:[#allocation9 + $0x8] sm:$0xff]
    %v138 = vld [vmem:[#allocation9 + $0x10] sm:$0xff]
    %v139 = vld [vmem:[#allocation9 + $0x18] sm:$0xff]
    %v140 = vld [vmem:[#allocation9 + $0x20] sm:$0xff]
    %v141 = vld [vmem:[#allocation9 + $0x28] sm:$0xff]
    %v142 = vld [vmem:[#allocation9 + $0x30] sm:$0xff]
    %v143 = vld [vmem:[#allocation9 + $0x38] sm:$0xff]
    %v144 = vld [vmem:[#allocation9 + $0x40] sm:$0xff]
    %v145 = vld [vmem:[#allocation9 + $0x48] sm:$0xff]
    %v146 = vld [vmem:[#allocation9 + $0x50] sm:$0xff]
    %v147 = vld [vmem:[#allocation9 + $0x58] sm:$0xff]
    %v148 = vld [vmem:[#allocation9 + $0x60] sm:$0xff]
    %v149 = vld [vmem:[#allocation9 + $0x68] sm:$0xff]
    %v150 = vld [vmem:[#allocation9 + $0x70] sm:$0xff]
    %v151 = vld [vmem:[#allocation9 + $0x78] sm:$0xff]
    %v152 = vld [vmem:[#allocation9 + $0x80] sm:$0xff]
    %v153 = vld [vmem:[#allocation9 + $0x88] sm:$0xff]
    %v154 = vld [vmem:[#allocation9 + $0x90] sm:$0xff]
    %v155 = vld [vmem:[#allocation9 + $0x98] sm:$0xff]
    %v156 = vld [vmem:[#allocation9 + $0xa0] sm:$0xff]
    %v157 = vld [vmem:[#allocation9 + $0xa8] sm:$0xff]
    %v158 = vld [vmem:[#allocation9 + $0xb0] sm:$0xff]
    %v159 = vld [vmem:[#allocation9 + $0xb8] sm:$0xff]
    %v160 = vld [vmem:[#allocation9 + $0xc0] sm:$0xff]
    %v161 = vld [vmem:[#allocation9 + $0xc8] sm:$0xff]
    %v162 = vld [vmem:[#allocation9 + $0xd0] sm:$0xff]
    %v163 = vld [vmem:[#allocation9 + $0xd8] sm:$0xff]
    %v164 = vld [vmem:[#allocation9 + $0xe0] sm:$0xff]
    %v165 = vld [vmem:[#allocation9 + $0xe8] sm:$0xff]
    %v166 = vld [vmem:[#allocation9 + $0xf0] sm:$0xff]
    %v167 = vld [vmem:[#allocation9 + $0xf8] sm:$0xf]
    %vm168 = vcmask 1031168
    %v170 = vsel %vm168, %v103, 0
    %vm172 = vcmask 1045504
    %v174 = vsel %vm172, %v134, 0
    %v177 = vsel %vm172, %v135, 0
    %179 = vmatpush.msra.mxu0 %v174
    %180 = vmatpush.msra.mxu0 %v132
    %181 = vmatpush.msra.mxu0 %v130
    %182 = vmatpush.msra.mxu0 %v128
    %183 = vmatpush.msra.mxu0 %v126
    %184 = vmatpush.msra.mxu0 %v124
    %185 = vmatpush.msra.mxu0 %v122
    %186 = vmatpush.msra.mxu0 %v120
    %187 = vmatpush.msra.mxu0 %v118
    %188 = vmatpush.msra.mxu0 %v116
    %189 = vmatpush.msra.mxu0 %v114
    %190 = vmatpush.msra.mxu0 %v112
    %191 = vmatpush.msra.mxu0 %v110
    %192 = vmatpush.msra.mxu0 %v108
    %193 = vmatpush.msra.mxu0 %v106
    %194 = vmatpush.msra.mxu0 %v104
    %195 = vmatmul.f32.gmra.mxu0 %v170
    %v196 = vpop.f32.mrf.mxu0
    %v197 = vadd.f32 0.0, %v196
    %198 = vdwg.mxu0
    %199 = vmatpush.msra.mxu0 %v177
    %200 = vmatpush.msra.mxu0 %v133
    %201 = vmatpush.msra.mxu0 %v131
    %202 = vmatpush.msra.mxu0 %v129
    %203 = vmatpush.msra.mxu0 %v127
    %204 = vmatpush.msra.mxu0 %v125
    %205 = vmatpush.msra.mxu0 %v123
    %206 = vmatpush.msra.mxu0 %v121
    %207 = vmatpush.msra.mxu0 %v119
    %208 = vmatpush.msra.mxu0 %v117
    %209 = vmatpush.msra.mxu0 %v115
    %210 = vmatpush.msra.mxu0 %v113
    %211 = vmatpush.msra.mxu0 %v111
    %212 = vmatpush.msra.mxu0 %v109
    %213 = vmatpush.msra.mxu0 %v107
    %214 = vmatpush.msra.mxu0 %v105
    %215 = vmatmul.f32.gmra.mxu0 %v170
    %v216 = vpop.f32.mrf.mxu0
    %v217 = vadd.f32 0.0, %v216
    %218 = vdwg.mxu0
    %v219 = vmax.f32 %v197, 0.0
    %v220 = vmax.f32 %v217, 0.0
    %vm221 = vcmask 1014784
    %v223 = vsel %vm221, %v220, 0
    %vm225 = vcmask 1043456
    %v227 = vsel %vm225, %v167, 0
    %229 = vmatpush.msra.mxu0 %v151
    %230 = vmatpush.msra.mxu0 %v150
    %231 = vmatpush.msra.mxu0 %v149
    %232 = vmatpush.msra.mxu0 %v148
    %233 = vmatpush.msra.mxu0 %v147
    %234 = vmatpush.msra.mxu0 %v146
    %235 = vmatpush.msra.mxu0 %v145
    %236 = vmatpush.msra.mxu0 %v144
    %237 = vmatpush.msra.mxu0 %v143
    %238 = vmatpush.msra.mxu0 %v142
    %239 = vmatpush.msra.mxu0 %v141
    %240 = vmatpush.msra.mxu0 %v140
    %241 = vmatpush.msra.mxu0 %v139
    %242 = vmatpush.msra.mxu0 %v138
    %243 = vmatpush.msra.mxu0 %v137
    %244 = vmatpush.msra.mxu0 %v136
    %245 = vmatmul.f32.gmra.mxu0 %v219
    %v246 = vpop.f32.mrf.mxu0
    %v247 = vadd.f32 0.0, %v246
    %248 = vdwg.mxu0
    %249 = vmatpush.msra.mxu0 %v227
    %250 = vmatpush.msra.mxu0 %v166
    %251 = vmatpush.msra.mxu0 %v165
    %252 = vmatpush.msra.mxu0 %v164
    %253 = vmatpush.msra.mxu0 %v163
    %254 = vmatpush.msra.mxu0 %v162
    %255 = vmatpush.msra.mxu0 %v161
    %256 = vmatpush.msra.mxu0 %v160
    %257 = vmatpush.msra.mxu0 %v159
    %258 = vmatpush.msra.mxu0 %v158
    %259 = vmatpush.msra.mxu0 %v157
    %260 = vmatpush.msra.mxu0 %v156
    %261 = vmatpush.msra.mxu0 %v155
    %262 = vmatpush.msra.mxu0 %v154
    %263 = vmatpush.msra.mxu0 %v153
    %264 = vmatpush.msra.mxu0 %v152
    %265 = vmatmul.f32.gmra.mxu0 %v223
    %v266 = vpop.f32.mrf.mxu0
    %v267 = vadd.f32 %v247, %v266
    %268 = vdwg.mxu0
    %v269 = vxor.u32 %v267, 2147483648
    %v270 = vmul.f32 %v269, 1.442695
    %v271 = vpow.pop %v270
    %v272 = vadd.f32 %v271, 1.0
    %v273 = vrcp.pop %v272
    %v274 = vmul.f32 %v272, %v273
    %v275 = vsub.f32 1.0, %v274
    %v276 = vmul.f32 %v273, %v275
    %v277 = vadd.f32 %v273, %v276
    %vm278 = vweird.f32 %v272
    %vm279 = vweird.f32 %v273
    %vm280 = vmor %vm278, %vm279
    %v281 = vsel %vm280, %v273, %v277
    %v282 = vand.u32 2147483647, %v272
    %vm283 = vcmp.eq.f32.partialorder %v282, 8.507059e+37
    %v284 = vand.u32 %v272, 2147483648
    %v285 = vor.u32 1.1754944e-38, %v284
    %v286 = vsel %vm283, %v285, %v281
    %v287 = vmul.f32 1.0, %v286
    %v288 = vmul.f32 %v101, 1.442695
    %v289 = vpow.pop %v288
    %v290 = vsel %vm102, %v289, 0.0
    %v291 = vld [vmem:[#allocation10] sm:$0xff]
    %v292 = vld [vmem:[#allocation10 + $0x8] sm:$0xff]
    %v293 = vld [vmem:[#allocation10 + $0x10] sm:$0xff]
    %v294 = vld [vmem:[#allocation10 + $0x18] sm:$0xff]
    %v295 = vld [vmem:[#allocation10 + $0x20] sm:$0xff]
    %v296 = vld [vmem:[#allocation10 + $0x28] sm:$0xff]
    %v297 = vld [vmem:[#allocation10 + $0x30] sm:$0xff]
    %v298 = vld [vmem:[#allocation10 + $0x38] sm:$0xff]
    %v299 = vld [vmem:[#allocation10 + $0x40] sm:$0xff]
    %v300 = vld [vmem:[#allocation10 + $0x48] sm:$0xff]
    %v301 = vld [vmem:[#allocation10 + $0x50] sm:$0xff]
    %v302 = vld [vmem:[#allocation10 + $0x58] sm:$0xff]
    %v303 = vld [vmem:[#allocation10 + $0x60] sm:$0xff]
    %v304 = vld [vmem:[#allocation10 + $0x68] sm:$0xff]
    %v305 = vld [vmem:[#allocation10 + $0x70] sm:$0xff]
    %v306 = vld [vmem:[#allocation10 + $0x78] sm:$0x3f]
    %v308 = vsel %vm168, %v290, 0
    %v311 = vsel %vm172, %v306, 0
    %313 = vmatpush.msra.mxu0 %v311
    %314 = vmatpush.msra.mxu0 %v305
    %315 = vmatpush.msra.mxu0 %v304
    %316 = vmatpush.msra.mxu0 %v303
    %317 = vmatpush.msra.mxu0 %v302
    %318 = vmatpush.msra.mxu0 %v301
    %319 = vmatpush.msra.mxu0 %v300
    %320 = vmatpush.msra.mxu0 %v299
    %321 = vmatpush.msra.mxu0 %v298
    %322 = vmatpush.msra.mxu0 %v297
    %323 = vmatpush.msra.mxu0 %v296
    %324 = vmatpush.msra.mxu0 %v295
    %325 = vmatpush.msra.mxu0 %v294
    %326 = vmatpush.msra.mxu0 %v293
    %327 = vmatpush.msra.mxu0 %v292
    %328 = vmatpush.msra.mxu0 %v291
    %329 = vmatmul.f32.gmra.mxu0 %v308
    %v330 = vpop.f32.mrf.mxu0
    %v331 = vadd.f32 0.0, %v330
    %332 = vdwg.mxu0
    %vm333 = vcmp.gt.f32.partialorder %v331, 0.0
    %v334 = vsel %vm333, %v331, 1.0
    %v335 = vrcp.pop %v334
    %v336 = vmul.f32 %v334, %v335
    %v337 = vsub.f32 2.0, %v336
    %v338 = vmul.f32 %v335, %v337
    %v339 = vmul.f32 %v290, %v338
    %v340 = vsel %vm333, %v339, 0.11111111
    %v341 = vmul.f32 %v340, %v287
    %342 = vst.msk [vmem:[#allocation12] sm:$0xff] %vm168, %v341
    // Predicated region
    $region42: #{tpu_custom_call.1} parent=1 // pred_check
      _
    $region43: #{tpu_custom_call.1} parent=1 // pred_check_branch
      %344 = sbr.rel (0) target = $region45
    $region44: #{tpu_custom_call.1} parent=1 // pred_region
      %346 = vsyncadd [#allocation4], 0
      %s348 = sshll.u32 [#allocation12], 4
      %s349 = int_to_ptr.vmem [resolvable:$true] %s348
      %s350 = sshll.u32 %s5, 4
      %s351 = int_to_ptr.hbm [resolvable:$true] %s350
      %353 = dma.vmem_to_hbm [thread:$0]  %s349, 128, %s351, [#allocation4]
    $region45: #{tpu_custom_call.1} parent=1 // pred_fallthru
      _
    // Predicated region
    $region46: #{tpu_custom_call.1} parent=1 // pred_check
      _
    $region47: #{tpu_custom_call.1} parent=1 // pred_check_branch
      %355 = sbr.rel (0) target = $region49
    $region48: #{tpu_custom_call.1} parent=1 // pred_region
      %357 = dma.done [#allocation4], 128
    $region49: #{tpu_custom_call.1} parent=1 // pred_fallthru
      _
    %358 = vsyncpa [#allocation3], 1
    %359 = vsyncpa [#allocation8], 1
    %360 = vsyncpa [#allocation11], 1
    %361 = vsyncpa [#allocation4], 1
    %362 = vsyncpa [#allocation5], 1

</llo_original>
